<compile_context>
chip_gen: v5e
topology: v5e:2x2
jax: 0.10.0
libtpu: 0.0.40
codegen_flags: <defaults>
</compile_context>

<pallas_src>
import functools

import numpy as np
import jax
import jax.numpy as jnp
from jax.experimental import pallas as pl
from jax.experimental.pallas import tpu as pltpu


# Deterministic "parameters": the module's only config is freq_bands.
FREQ_BANDS = ((1, 2), (2, 1), (3, 3), (4, 0))

_PACK = 2            # 8x8 blocks packed per 128-lane row
_TARGET_ROWS = 2048  # packed rows per grid step (~1 MiB f32 input tile)


def _cdiv(a, b):
    return -(-a // b)


def _round_up(a, b):
    return _cdiv(a, b) * b


def _packed_weights(freq_bands, pack):
    """Fused DFT / magnitude-pairing / slot-fold weight matrices (f32)."""
    n_bands = len(freq_bands)
    p = np.arange(8)[:, None]
    q = np.arange(8)[None, :]
    cols = []
    for (u, v) in freq_bands:
        theta = 2.0 * np.pi * ((u % 8) * p + (v % 8) * q) / 8.0
        cols.append(np.cos(theta).reshape(64))
    for (u, v) in freq_bands:
        theta = 2.0 * np.pi * ((u % 8) * p + (v % 8) * q) / 8.0
        cols.append(np.sin(theta).reshape(64))
    w = np.stack(cols, axis=1)                                  # (64, 2F): [cos | sin]

    w_packed = np.kron(np.eye(pack), w)                         # (64*pack, 2F*pack)
    # re_f^2 + im_f^2 pairing, per packed slot
    pair = np.concatenate([np.eye(n_bands), np.eye(n_bands)], axis=0)   # (2F, F)
    pair_packed = np.kron(np.eye(pack), pair)                   # (2F*pack, F*pack)
    # add the packed slots back together per band
    fold = np.kron(np.ones((pack, 1)), np.eye(n_bands))         # (F*pack, F)
    return (jnp.asarray(w_packed, dtype=jnp.float32),
            jnp.asarray(pair_packed, dtype=jnp.float32),
            jnp.asarray(fold, dtype=jnp.float32))


def _dct_band_kernel(p_ref, w_ref, pair_ref, fold_ref, seg_ref, o_ref, *,
                     inv_n_blocks):
    # p_ref   : (RT, 128)     RT packed rows (2 blocks each), caller's dtype
    # w_ref   : (128, 4F)     fused cos|sin DFT weights (block-diag over slots)
    # pair_ref: (4F, 2F)      re^2 + im^2 pairing, per packed slot
    # fold_ref: (2F, F)       adds the two packed slots per band
    # seg_ref : (TBC, RT)     0/1 selector -> per-(b,c) segment sums
    # o_ref   : (1, TBC, F)   per-(b,c) per-band accumulator (resident over j)
    j = pl.program_id(1)

    @pl.when(j == 0)
    def _init():
        o_ref[...] = jnp.zeros_like(o_ref)

    x = p_ref[...].astype(jnp.float32)                                       # cast after DMA
    z = jnp.dot(x, w_ref[...], preferred_element_type=jnp.float32)           # (RT, 4F) re|im
    sq = jnp.dot(z * z, pair_ref[...], preferred_element_type=jnp.float32)   # (RT, 2F) |F|^2
    mag = jnp.sqrt(sq)                                                        # (RT, 2F) |F|
    seg = jnp.dot(seg_ref[...], mag, preferred_element_type=jnp.float32)      # (TBC, 2F)
    contrib = jnp.dot(seg, fold_ref[...], preferred_element_type=jnp.float32)  # (TBC, F)
    o_ref[...] += contrib[None]

    @pl.when(j == pl.num_programs(1) - 1)
    def _finalize():
        o_ref[...] *= inv_n_blocks


def dct_block_extract(x, freq_bands=FREQ_BANDS):
    # Replicate the PyTorch axis-swap quirk exactly.
    if x.shape[1] != 3:
        x = jnp.transpose(x, (0, 2, 1, 3))
    B, C, H, W = x.shape
    nH, nW = H // 8, W // 8
    n_blocks = nH * nW
    if n_blocks == 0:
        raise ValueError("DCTBlockExtractor needs H >= 8 and W >= 8")
    n_bands = len(freq_bands)
    bc = B * C

    # ---- 8x8 block extraction (wrapper-side), kept in the caller's dtype ----
    # TODO(synk): fold the unfold/transpose into the kernel (strided VMEM
    # gather) to remove this one extra HBM round trip of the image.
    xb = x[:, :, : nH * 8, : nW * 8]
    pat = xb.reshape(bc, nH, 8, nW, 8).transpose(0, 1, 3, 2, 4)
    pat = pat.reshape(bc, n_blocks, 64)

    # ---- tiling parameters ----
    npr = _cdiv(n_blocks, _PACK)                      # packed rows per (b, c)
    n_chunks = max(1, _cdiv(npr, _TARGET_ROWS))       # reduction steps over blocks
    chunk = _round_up(_cdiv(npr, n_chunks), 8)        # packed rows per reduction step
    npr_p = chunk * n_chunks
    # Batch several (b, c) rows per step only when per-(b, c) work is small.
    if n_chunks == 1 and chunk < 512 and bc >= 16:
        tbc = 8
    else:
        tbc = 1
    bc_p = _round_up(bc, tbc)
    g0 = bc_p // tbc
    rt = tbc * chunk                                  # packed rows per grid step

    # Zero padding is harmless: |FFT2(0)| = 0 adds nothing to the block sum and
    # we divide by the true n_blocks; padded (b, c) rows are sliced off below.
    pat = jnp.pad(pat, ((0, bc_p - bc), (0, npr_p * _PACK - n_blocks), (0, 0)))
    pat = pat.reshape(bc_p, npr_p, _PACK * 64).reshape(bc_p * npr_p, _PACK * 64)

    w_packed, pair_packed, fold = _packed_weights(freq_bands, _PACK)
    seg_sel = jnp.asarray(np.kron(np.eye(tbc), np.ones((1, chunk))),
                          dtype=jnp.float32)

    kernel = functools.partial(_dct_band_kernel, inv_n_blocks=1.0 / n_blocks)

    itemsize = jnp.dtype(pat.dtype).itemsize
    cost = pl.CostEstimate(
        flops=int(2 * bc_p * npr_p * (_PACK * 64) * (_PACK * 2 * n_bands)),
        transcendentals=int(bc_p * npr_p * _PACK * n_bands),
        bytes_accessed=int(pat.size * itemsize + g0 * tbc * n_bands * 4),
    )

    out = pl.pallas_call(
        kernel,
        out_shape=jax.ShapeDtypeStruct((g0, tbc, n_bands), jnp.float32),
        grid=(g0, n_chunks),
        in_specs=[
            pl.BlockSpec((rt, _PACK * 64), lambda i, j: (i * n_chunks + j, 0)),
            pl.BlockSpec(w_packed.shape, lambda i, j: (0, 0)),
            pl.BlockSpec(pair_packed.shape, lambda i, j: (0, 0)),
            pl.BlockSpec(fold.shape, lambda i, j: (0, 0)),
            pl.BlockSpec(seg_sel.shape, lambda i, j: (0, 0)),
        ],
        out_specs=pl.BlockSpec((1, tbc, n_bands), lambda i, j: (i, 0, 0)),
        compiler_params=pltpu.CompilerParams(
            dimension_semantics=("parallel", "arbitrary"),
            vmem_limit_bytes=32 * 1024 * 1024,
        ),
        cost_estimate=cost,
    )(pat, w_packed, pair_packed, fold, seg_sel)

    feats = out.reshape(bc_p, n_bands)[:bc]           # (B*C, F)
    return feats.reshape(B, C * n_bands)              # features.view(B, -1)


def _reference(x, freq_bands=FREQ_BANDS):
    """Pure-JAX reference mirroring the PyTorch forward (fft2 + abs + mean)."""
    if x.shape[1] != 3:
        x = jnp.transpose(x, (0, 2, 1, 3))
    B, C, H, W = x.shape
    nH, nW = H // 8, W // 8
    xb = x[:, :, : nH * 8, : nW * 8]
    patches = xb.reshape(B, C, nH, 8, nW, 8).transpose(0, 1, 2, 4, 3, 5)
    dct = jnp.abs(jnp.fft.fft2(patches))
    feats = [dct[..., u % 8, v % 8].mean(axis=(2, 3)) for (u, v) in freq_bands]
    feats = jnp.stack(feats, axis=2)                  # (B, C, F)
    return feats.reshape(B, -1)


if __name__ == "__main__":
    key = jax.random.PRNGKey(0)
    # channels == 3, so the permute branch is skipped (typical RGB input).
    x = jax.random.normal(key, (2, 3, 16, 16), dtype=jnp.float32)

    out = jax.block_until_ready(dct_block_extract(x))
    ref = _reference(x)

    assert out.shape == (2, 3 * len(FREQ_BANDS)), out.shape
    np.testing.assert_allclose(np.asarray(out), np.asarray(ref),
                               rtol=1e-4, atol=1e-4)
    print("KERNEL_OK")
</pallas_src>

<mosaic_0001>
module attributes {stable_mosaic.version = 11 : i64} {
  func.func @_dct_band_kernel(%arg0: i32, %arg1: i32, %arg2: memref<8x128xf32, #tpu.memory_space<vmem>>, %arg3: memref<128x16xf32, #tpu.memory_space<vmem>>, %arg4: memref<16x8xf32, #tpu.memory_space<vmem>>, %arg5: memref<8x4xf32, #tpu.memory_space<vmem>>, %arg6: memref<1x8xf32, #tpu.memory_space<vmem>>, %arg7: memref<1x1x4xf32, #tpu.memory_space<vmem>>) attributes {dimension_semantics = [#tpu.dimension_semantics<parallel>, #tpu.dimension_semantics<arbitrary>], iteration_bounds = array<i64: 6, 1>, scalar_prefetch = 0 : i64, scratch_operands = 0 : i64, tpu.core_type = #tpu.core_type<tc>, window_params = [{transform_indices = @transform_0, window_bounds = array<i64: 8, 128>}, {pipeline_mode = #tpu.pipeline_mode<synchronous>, transform_indices = @transform_1, window_bounds = array<i64: 128, 16>}, {pipeline_mode = #tpu.pipeline_mode<synchronous>, transform_indices = @transform_2, window_bounds = array<i64: 16, 8>}, {pipeline_mode = #tpu.pipeline_mode<synchronous>, transform_indices = @transform_3, window_bounds = array<i64: 8, 4>}, {pipeline_mode = #tpu.pipeline_mode<synchronous>, transform_indices = @transform_4, window_bounds = array<i64: 1, 8>}, {transform_indices = @transform_5, window_bounds = array<i64: 1, 1, 4>}]} {
    %c0_i32 = arith.constant 0 : i32
    %0 = arith.cmpi eq, %arg1, %c0_i32 : i32
    %1 = arith.extui %0 : i1 to i32
    %c0_i32_0 = arith.constant 0 : i32
    %2 = arith.cmpi ne, %1, %c0_i32_0 : i32
    scf.if %2 {
      %cst_21 = arith.constant 0.000000e+00 : f32
      %21 = vector.broadcast %cst_21 : f32 to vector<1x1x4xf32>
      %c0_22 = arith.constant 0 : index
      %c0_23 = arith.constant 0 : index
      %c0_24 = arith.constant 0 : index
      %22 = vector.load %arg7[%c0_22, %c0_23, %c0_24] : memref<1x1x4xf32, #tpu.memory_space<vmem>>, vector<1x1x4xf32>
      tpu.vector_store %arg7[%c0_22, %c0_23, %c0_24], %21 {strides = array<i32>} : memref<1x1x4xf32, #tpu.memory_space<vmem>>, vector<1x1x4xf32>,
    } else {
    }
    %c0 = arith.constant 0 : index
    %c0_1 = arith.constant 0 : index
    %3 = vector.load %arg2[%c0, %c0_1] : memref<8x128xf32, #tpu.memory_space<vmem>>, vector<8x128xf32>
    %c0_2 = arith.constant 0 : index
    %c0_3 = arith.constant 0 : index
    %4 = vector.load %arg3[%c0_2, %c0_3] : memref<128x16xf32, #tpu.memory_space<vmem>>, vector<128x16xf32>
    %cst = arith.constant dense<0.000000e+00> : vector<8x16xf32>
    %5 = tpu.matmul %3, %4, %cst {dimension_numbers = #tpu.dot_dimension_numbers<[1], [0], [0], [1], [0, 0, 1, 1], [], []>} : vector<8x128xf32>, vector<128x16xf32>, vector<8x16xf32> -> vector<8x16xf32>
    %6 = arith.mulf %5, %5 : vector<8x16xf32>
    %c0_4 = arith.constant 0 : index
    %c0_5 = arith.constant 0 : index
    %7 = vector.load %arg4[%c0_4, %c0_5] : memref<16x8xf32, #tpu.memory_space<vmem>>, vector<16x8xf32>
    %cst_6 = arith.constant dense<0.000000e+00> : vector<8x8xf32>
    %8 = tpu.matmul %6, %7, %cst_6 {dimension_numbers = #tpu.dot_dimension_numbers<[1], [0], [0], [1], [0, 0, 1, 1], [], []>} : vector<8x16xf32>, vector<16x8xf32>, vector<8x8xf32> -> vector<8x8xf32>
    %9 = math.sqrt %8 : vector<8x8xf32>
    %c0_7 = arith.constant 0 : index
    %c0_8 = arith.constant 0 : index
    %10 = vector.load %arg6[%c0_7, %c0_8] : memref<1x8xf32, #tpu.memory_space<vmem>>, vector<1x8xf32>
    %cst_9 = arith.constant dense<0.000000e+00> : vector<1x8xf32>
    %11 = tpu.matmul %10, %9, %cst_9 {dimension_numbers = #tpu.dot_dimension_numbers<[1], [0], [0], [1], [0, 0, 1, 1], [], []>} : vector<1x8xf32>, vector<8x8xf32>, vector<1x8xf32> -> vector<1x8xf32>
    %c0_10 = arith.constant 0 : index
    %c0_11 = arith.constant 0 : index
    %12 = vector.load %arg5[%c0_10, %c0_11] : memref<8x4xf32, #tpu.memory_space<vmem>>, vector<8x4xf32>
    %cst_12 = arith.constant dense<0.000000e+00> : vector<1x4xf32>
    %13 = tpu.matmul %11, %12, %cst_12 {dimension_numbers = #tpu.dot_dimension_numbers<[1], [0], [0], [1], [0, 0, 1, 1], [], []>} : vector<1x8xf32>, vector<8x4xf32>, vector<1x4xf32> -> vector<1x4xf32>
    %c0_13 = arith.constant 0 : index
    %c0_14 = arith.constant 0 : index
    %c0_15 = arith.constant 0 : index
    %14 = vector.load %arg7[%c0_13, %c0_14, %c0_15] : memref<1x1x4xf32, #tpu.memory_space<vmem>>, vector<1x1x4xf32>
    %15 = vector.shape_cast %13 : vector<1x4xf32> to vector<1x1x4xf32>
    %16 = arith.addf %14, %15 : vector<1x1x4xf32>
    %c0_16 = arith.constant 0 : index
    %c0_17 = arith.constant 0 : index
    %c0_18 = arith.constant 0 : index
    %17 = vector.load %arg7[%c0_16, %c0_17, %c0_18] : memref<1x1x4xf32, #tpu.memory_space<vmem>>, vector<1x1x4xf32>
    tpu.vector_store %arg7[%c0_16, %c0_17, %c0_18], %16 {strides = array<i32>} : memref<1x1x4xf32, #tpu.memory_space<vmem>>, vector<1x1x4xf32>,
    %c0_i32_19 = arith.constant 0 : i32
    %18 = arith.cmpi eq, %arg1, %c0_i32_19 : i32
    %19 = arith.extui %18 : i1 to i32
    %c0_i32_20 = arith.constant 0 : i32
    %20 = arith.cmpi ne, %19, %c0_i32_20 : i32
    scf.if %20 {
      %c0_21 = arith.constant 0 : index
      %c0_22 = arith.constant 0 : index
      %c0_23 = arith.constant 0 : index
      %21 = vector.load %arg7[%c0_21, %c0_22, %c0_23] : memref<1x1x4xf32, #tpu.memory_space<vmem>>, vector<1x1x4xf32>
      %cst_24 = arith.constant 2.500000e-01 : f32
      %22 = vector.broadcast %cst_24 : f32 to vector<1x1x4xf32>
      %23 = arith.mulf %21, %22 : vector<1x1x4xf32>
      %c0_25 = arith.constant 0 : index
      %c0_26 = arith.constant 0 : index
      %c0_27 = arith.constant 0 : index
      %24 = vector.load %arg7[%c0_25, %c0_26, %c0_27] : memref<1x1x4xf32, #tpu.memory_space<vmem>>, vector<1x1x4xf32>
      tpu.vector_store %arg7[%c0_25, %c0_26, %c0_27], %23 {strides = array<i32>} : memref<1x1x4xf32, #tpu.memory_space<vmem>>, vector<1x1x4xf32>,
    } else {
    }
    return
  }
  func.func @transform_0(%arg0: i32, %arg1: i32) -> (i32, i32) {
    %c1_i32 = arith.constant 1 : i32
    %0 = arith.muli %arg0, %c1_i32 : i32
    %1 = arith.addi %0, %arg1 : i32
    %c0_i32 = arith.constant 0 : i32
    %c0_i32_0 = arith.constant 0 : i32
    return %1, %c0_i32 : i32, i32
  }
  func.func @transform_1(%arg0: i32, %arg1: i32) -> (i32, i32) {
    %c0_i32 = arith.constant 0 : i32
    %c0_i32_0 = arith.constant 0 : i32
    %c0_i32_1 = arith.constant 0 : i32
    return %c0_i32, %c0_i32_0 : i32, i32
  }
  func.func @transform_2(%arg0: i32, %arg1: i32) -> (i32, i32) {
    %c0_i32 = arith.constant 0 : i32
    %c0_i32_0 = arith.constant 0 : i32
    %c0_i32_1 = arith.constant 0 : i32
    return %c0_i32, %c0_i32_0 : i32, i32
  }
  func.func @transform_3(%arg0: i32, %arg1: i32) -> (i32, i32) {
    %c0_i32 = arith.constant 0 : i32
    %c0_i32_0 = arith.constant 0 : i32
    %c0_i32_1 = arith.constant 0 : i32
    return %c0_i32, %c0_i32_0 : i32, i32
  }
  func.func @transform_4(%arg0: i32, %arg1: i32) -> (i32, i32) {
    %c0_i32 = arith.constant 0 : i32
    %c0_i32_0 = arith.constant 0 : i32
    %c0_i32_1 = arith.constant 0 : i32
    return %c0_i32, %c0_i32_0 : i32, i32
  }
  func.func @transform_5(%arg0: i32, %arg1: i32) -> (i32, i32, i32) {
    %c0_i32 = arith.constant 0 : i32
    %c0_i32_0 = arith.constant 0 : i32
    %c0_i32_1 = arith.constant 0 : i32
    return %arg0, %c0_i32, %c0_i32_0 : i32, i32, i32
  }
}

</mosaic_0001>

<llo_original>
// kernel: tpu_custom_call.1
$region0: #{tpu_custom_call.1}
  #allocation0 [shape = 'u32[]', space=smem, size = 0x4, offset = 0x4, fixed_abs, tag = 'smem constant byte address 0x4 - core index']
  #allocation1 [shape = 'u32[72,128]{1,0:T(1,128)}', space=vmem, size = 0x9000, scoped, tag = 'internal scratch']
  %s0 = inlined_call_operand.vmem [shape: f32[48,128], index: 0, kind: input, shape index: {}]
  %s1 = inlined_call_operand.vmem [shape: f32[128,16], index: 1, kind: input, shape index: {}]
  %s2 = inlined_call_operand.vmem [shape: f32[16,8], index: 2, kind: input, shape index: {}]
  %s3 = inlined_call_operand.vmem [shape: f32[8,4], index: 3, kind: input, shape index: {}]
  %s4 = inlined_call_operand.vmem [shape: f32[1,8], index: 4, kind: input, shape index: {}]
  %s5 = inlined_call_operand.vmem [shape: f32[6,1,4], index: 5, kind: output, shape index: {}]
  %s6 = sld [smem:[#allocation0]]
  $region61: #{tpu_custom_call.1} parent=0
    _
  %s8 = ssub.s32 1, %s6
  %s9 = scalar_select 0, %s8, %s6
  loop: start=0, step=1, limit=8
  $region2: #{tpu_custom_call.1} parent=0 // loop_pre_header
    _
  $region3: #{tpu_custom_call.1} parent=0 // loop_header
    %s11 = sphi 0, %s15
    %p12 = scmp.ge.s32.totalorder %s11, 8
    %s18 = sphi 0, %s30
    %s19 = sphi 0, %s26
    %s20 = sphi 0, %s18
    %s21 = sphi 0, %s19
    %s22 = sphi 0, %s20
    %s23 = sphi 0, %s21
    %s35 = sphi 0, %s37
    %s38 = sphi 0, %s35
    %s39 = sphi 0, %s38
    %s55 = sphi 0, %s39
    %s59 = sphi 0, %s59
    %s61 = sphi 0, %s59
    %s62 = sphi 0, %s61
    %s76 = sphi 0, %s62
    %s80 = sphi 0, %s80
    %s82 = sphi 0, %s80
    %s83 = sphi 0, %s82
    %s97 = sphi 0, %s83
    %s101 = sphi 0, %s101
    %s103 = sphi 0, %s101
    %s104 = sphi 0, %s103
    %s118 = sphi 0, %s104
    %s122 = sphi 0, %s122
    %s124 = sphi 0, %s122
    %s125 = sphi 0, %s124
    %s139 = sphi 0, %s125
    %s145 = sphi 0, %s147
    %s148 = sphi 0, %s145
    %s149 = sphi 0, %s148
    %s165 = sphi 0, %s149
  $region4: #{tpu_custom_call.1} parent=0 // loop_header_branch
    %14 = sbr.rel (%p12) target = $region8
  $region5: #{tpu_custom_call.1} parent=0 // loop_body
    %s16 = ssub.s32 %s11, 1
    %s17 = ssub.s32 %s11, 2
    %s24 = sadd.s32 1, %s19
    %p25 = scmp.ge.s32.totalorder %s24, 1
    %s26 = scalar_select %p25, 0, %s24
    %s27 = sadd.s32 1, %s18
    %s28 = scalar_select %p25, %s27, %s18
    %p29 = scmp.ge.s32.totalorder %s28, 6
    %s30 = scalar_select %p29, 0, %s28
    %s31 = sadd.s32 %s18, %s19
    %s32 = sadd.s32 %s30, %s26
    %s33 = ssub.s32 %s31, %s32
    %p34 = scmp.eq.s32.totalorder %s33, 0
    %s36 = sadd.s32 %s35, 1
    %s37 = scalar_select %p34, %s35, %s36
    %p40 = pneg %p34
    %p41 = scmp.eq.s32.totalorder %s11, 5
    %p42 = por %p40, %p41
    %p43 = scmp.ne.s32.totalorder %s35, %s38
    %p44 = scmp.eq.s32.totalorder %s11, 0
    %p45 = por %p43, %p44
    %p46 = scmp.ne.s32.totalorder %s35, %s38
    %p47 = scmp.eq.s32.totalorder %s16, 5
    %p48 = por %p46, %p47
    %p49 = scmp.ne.s32.totalorder %s38, %s39
    %p50 = scmp.eq.s32.totalorder %s16, 0
    %p51 = por %p49, %p50
    %p52 = scmp.ne.s32.totalorder %s38, %s39
    %p53 = scmp.eq.s32.totalorder %s17, 5
    %p54 = por %p52, %p53
    %p56 = scmp.ne.s32.totalorder %s39, %s55
    %p57 = scmp.eq.s32.totalorder %s17, 0
    %p58 = por %p56, %p57
    %s60 = sadd.s32 %s59, 1
    %p63 = scmp.eq.s32.totalorder %s11, 5
    %p64 = scmp.ne.s32.totalorder %s59, %s61
    %p65 = scmp.eq.s32.totalorder %s11, 0
    %p66 = por %p64, %p65
    %p67 = scmp.ne.s32.totalorder %s59, %s61
    %p68 = scmp.eq.s32.totalorder %s16, 5
    %p69 = por %p67, %p68
    %p70 = scmp.ne.s32.totalorder %s61, %s62
    %p71 = scmp.eq.s32.totalorder %s16, 0
    %p72 = por %p70, %p71
    %p73 = scmp.ne.s32.totalorder %s61, %s62
    %p74 = scmp.eq.s32.totalorder %s17, 5
    %p75 = por %p73, %p74
    %p77 = scmp.ne.s32.totalorder %s62, %s76
    %p78 = scmp.eq.s32.totalorder %s17, 0
    %p79 = por %p77, %p78
    %s81 = sadd.s32 %s80, 1
    %p84 = scmp.eq.s32.totalorder %s11, 5
    %p85 = scmp.ne.s32.totalorder %s80, %s82
    %p86 = scmp.eq.s32.totalorder %s11, 0
    %p87 = por %p85, %p86
    %p88 = scmp.ne.s32.totalorder %s80, %s82
    %p89 = scmp.eq.s32.totalorder %s16, 5
    %p90 = por %p88, %p89
    %p91 = scmp.ne.s32.totalorder %s82, %s83
    %p92 = scmp.eq.s32.totalorder %s16, 0
    %p93 = por %p91, %p92
    %p94 = scmp.ne.s32.totalorder %s82, %s83
    %p95 = scmp.eq.s32.totalorder %s17, 5
    %p96 = por %p94, %p95
    %p98 = scmp.ne.s32.totalorder %s83, %s97
    %p99 = scmp.eq.s32.totalorder %s17, 0
    %p100 = por %p98, %p99
    %s102 = sadd.s32 %s101, 1
    %p105 = scmp.eq.s32.totalorder %s11, 5
    %p106 = scmp.ne.s32.totalorder %s101, %s103
    %p107 = scmp.eq.s32.totalorder %s11, 0
    %p108 = por %p106, %p107
    %p109 = scmp.ne.s32.totalorder %s101, %s103
    %p110 = scmp.eq.s32.totalorder %s16, 5
    %p111 = por %p109, %p110
    %p112 = scmp.ne.s32.totalorder %s103, %s104
    %p113 = scmp.eq.s32.totalorder %s16, 0
    %p114 = por %p112, %p113
    %p115 = scmp.ne.s32.totalorder %s103, %s104
    %p116 = scmp.eq.s32.totalorder %s17, 5
    %p117 = por %p115, %p116
    %p119 = scmp.ne.s32.totalorder %s104, %s118
    %p120 = scmp.eq.s32.totalorder %s17, 0
    %p121 = por %p119, %p120
    %s123 = sadd.s32 %s122, 1
    %p126 = scmp.eq.s32.totalorder %s11, 5
    %p127 = scmp.ne.s32.totalorder %s122, %s124
    %p128 = scmp.eq.s32.totalorder %s11, 0
    %p129 = por %p127, %p128
    %p130 = scmp.ne.s32.totalorder %s122, %s124
    %p131 = scmp.eq.s32.totalorder %s16, 5
    %p132 = por %p130, %p131
    %p133 = scmp.ne.s32.totalorder %s124, %s125
    %p134 = scmp.eq.s32.totalorder %s16, 0
    %p135 = por %p133, %p134
    %p136 = scmp.ne.s32.totalorder %s124, %s125
    %p137 = scmp.eq.s32.totalorder %s17, 5
    %p138 = por %p136, %p137
    %p140 = scmp.ne.s32.totalorder %s125, %s139
    %p141 = scmp.eq.s32.totalorder %s17, 0
    %p142 = por %p140, %p141
    %s143 = ssub.s32 %s18, %s30
    %p144 = scmp.eq.s32.totalorder %s143, 0
    %s146 = sadd.s32 %s145, 1
    %s147 = scalar_select %p144, %s145, %s146
    %p150 = pneg %p144
    %p151 = scmp.eq.s32.totalorder %s11, 5
    %p152 = por %p150, %p151
    %p153 = scmp.ne.s32.totalorder %s145, %s148
    %p154 = scmp.eq.s32.totalorder %s11, 0
    %p155 = por %p153, %p154
    %p156 = scmp.ne.s32.totalorder %s145, %s148
    %p157 = scmp.eq.s32.totalorder %s16, 5
    %p158 = por %p156, %p157
    %p159 = scmp.ne.s32.totalorder %s148, %s149
    %p160 = scmp.eq.s32.totalorder %s16, 0
    %p161 = por %p159, %p160
    %p162 = scmp.ne.s32.totalorder %s148, %s149
    %p163 = scmp.eq.s32.totalorder %s17, 5
    %p164 = por %p162, %p163
    %p166 = scmp.ne.s32.totalorder %s149, %s165
    %p167 = scmp.eq.s32.totalorder %s17, 0
    %p168 = por %p166, %p167
    %p169 = scmp.le.s32.totalorder 1, %s11
    %p170 = scmp.lt.s32.totalorder %s11, 7
    %p171 = pnand %p169, %p170
    %p172 = pneg %p171
    // Predicated region
    $region9: #{tpu_custom_call.1} parent=5 // pred_check
      _
    $region10: #{tpu_custom_call.1} parent=5 // pred_check_branch
      %174 = sbr.rel (%p171) target = $region12
    $region11: #{tpu_custom_call.1} parent=5 // pred_region
      %s175 = ssub.s32 %s11, 1
      // Predicated region
      $region13: #{tpu_custom_call.1} parent=11 // pred_check
        %p176 = pneg %p72
      $region14: #{tpu_custom_call.1} parent=11 // pred_check_branch
        %178 = sbr.rel (%p176) target = $region16
      $region15: #{tpu_custom_call.1} parent=11 // pred_region
        _
      $region16: #{tpu_custom_call.1} parent=11 // pred_fallthru
        _
      // Predicated region
      $region17: #{tpu_custom_call.1} parent=11 // pred_check
        %p179 = pneg %p93
      $region18: #{tpu_custom_call.1} parent=11 // pred_check_branch
        %181 = sbr.rel (%p179) target = $region20
      $region19: #{tpu_custom_call.1} parent=11 // pred_region
        _
      $region20: #{tpu_custom_call.1} parent=11 // pred_fallthru
        _
      // Predicated region
      $region21: #{tpu_custom_call.1} parent=11 // pred_check
        %p182 = pneg %p114
      $region22: #{tpu_custom_call.1} parent=11 // pred_check_branch
        %184 = sbr.rel (%p182) target = $region24
      $region23: #{tpu_custom_call.1} parent=11 // pred_region
        _
      $region24: #{tpu_custom_call.1} parent=11 // pred_fallthru
        _
      // Predicated region
      $region25: #{tpu_custom_call.1} parent=11 // pred_check
        %p185 = pneg %p135
      $region26: #{tpu_custom_call.1} parent=11 // pred_check_branch
        %187 = sbr.rel (%p185) target = $region28
      $region27: #{tpu_custom_call.1} parent=11 // pred_region
        _
      $region28: #{tpu_custom_call.1} parent=11 // pred_fallthru
        _
    $region12: #{tpu_custom_call.1} parent=5 // pred_fallthru
      _
    %p188 = scmp.lt.s32.totalorder %s11, 6
    // Predicated region
    $region29: #{tpu_custom_call.1} parent=5 // pred_check
      %p189 = pneg %p188
    $region30: #{tpu_custom_call.1} parent=5 // pred_check_branch
      %191 = sbr.rel (%p189) target = $region32
    $region31: #{tpu_custom_call.1} parent=5 // pred_region
      // Predicated region
      $region33: #{tpu_custom_call.1} parent=31 // pred_check
        %p192 = pneg %p45
      $region34: #{tpu_custom_call.1} parent=31 // pred_check_branch
        %194 = sbr.rel (%p192) target = $region36
      $region35: #{tpu_custom_call.1} parent=31 // pred_region
        %s195 = sadd.s32 %s18, %s19
        %p196 = scmp.lt.s32.totalorder %s195, 5
        %s197 = scalar_select %p196, %s195, 5
        %s198 = smul.addr %s197, 8
        %s199 = scalar_lea.vmem %s0, %s198
        %s200 = sadd.s32 %s18, %s19
      $region36: #{tpu_custom_call.1} parent=31 // pred_fallthru
        _
    $region32: #{tpu_custom_call.1} parent=5 // pred_fallthru
      _
    %p201 = scmp.le.s32.totalorder 1, %s11
    %p202 = scmp.lt.s32.totalorder %s11, 7
    %p203 = pnand %p201, %p202
    %p204 = pneg %p203
    // Predicated region
    $region37: #{tpu_custom_call.1} parent=5 // pred_check
      _
    $region38: #{tpu_custom_call.1} parent=5 // pred_check_branch
      %206 = sbr.rel (%p203) target = $region40
    $region39: #{tpu_custom_call.1} parent=5 // pred_region
      %s207 = ssub.s32 %s11, 1
      %s208 = sadd.s32 %s20, %s21
      %p209 = scmp.lt.s32.totalorder %s208, 5
      %s210 = scalar_select %p209, %s208, 5
      %s211 = smul.addr %s210, 8
      %s212 = scalar_lea.vmem %s0, %s211
      %p213 = pneg %p51
      %p214 = pneg %p48
      %p215 = pneg %p72
      %p216 = pneg %p69
      %p217 = pneg %p93
      %p218 = pneg %p90
      %p219 = pneg %p114
      %p220 = pneg %p111
      %p221 = pneg %p135
      %p222 = pneg %p132
      %p223 = pneg %p161
      %p224 = pneg %p158
      %p225 = scmp.lt.s32.totalorder %s20, 5
      %s226 = scalar_select %p225, %s20, 5
      %s227 = scalar_lea.vmem %s5, %s226
      %s228 = sadd.s32 %s20, %s21
      %p229 = scmp.lt.s32.totalorder %s228, 5
      %s230 = scalar_select %p229, %s228, 5
      %s231 = smul.addr %s230, 8
      %s232 = scalar_lea.vmem %s0, %s231
      %s233 = sadd.s32 %s20, %s21
      %p234 = scmp.lt.s32.totalorder %s20, 5
      %s235 = scalar_select %p234, %s20, 5
      %s236 = scalar_lea.vmem %s5, %s235
      %p237 = scmp.eq.s32.totalorder %s21, 0
      // Predicated region
      $region41: #{tpu_custom_call.1} parent=39 // pred_check
        %p238 = pneg %p237
      $region42: #{tpu_custom_call.1} parent=39 // pred_check_branch
        %240 = sbr.rel (%p238) target = $region44
      $region43: #{tpu_custom_call.1} parent=39 // pred_region
        %vm241 = vcmask 24576
        %242 = vst.msk [vmem:[%s236] sm:$0x1] %vm241, 0.0
      $region44: #{tpu_custom_call.1} parent=39 // pred_fallthru
        _
      %v243 = vld [vmem:[%s232] sm:$0xff]
      %v244 = vld [vmem:[%s1] sm:$0xff]
      %v245 = vld [vmem:[%s1 + $0x8] sm:$0xff]
      %v246 = vld [vmem:[%s1 + $0x10] sm:$0xff]
      %v247 = vld [vmem:[%s1 + $0x18] sm:$0xff]
      %v248 = vld [vmem:[%s1 + $0x20] sm:$0xff]
      %v249 = vld [vmem:[%s1 + $0x28] sm:$0xff]
      %v250 = vld [vmem:[%s1 + $0x30] sm:$0xff]
      %v251 = vld [vmem:[%s1 + $0x38] sm:$0xff]
      %v252 = vld [vmem:[%s1 + $0x40] sm:$0xff]
      %v253 = vld [vmem:[%s1 + $0x48] sm:$0xff]
      %v254 = vld [vmem:[%s1 + $0x50] sm:$0xff]
      %v255 = vld [vmem:[%s1 + $0x58] sm:$0xff]
      %v256 = vld [vmem:[%s1 + $0x60] sm:$0xff]
      %v257 = vld [vmem:[%s1 + $0x68] sm:$0xff]
      %v258 = vld [vmem:[%s1 + $0x70] sm:$0xff]
      %v259 = vld [vmem:[%s1 + $0x78] sm:$0xff]
      %260 = vmatpush.msra.mxu0 %v259
      %261 = vmatpush.msra.mxu0 %v258
      %262 = vmatpush.msra.mxu0 %v257
      %263 = vmatpush.msra.mxu0 %v256
      %264 = vmatpush.msra.mxu0 %v255
      %265 = vmatpush.msra.mxu0 %v254
      %266 = vmatpush.msra.mxu0 %v253
      %267 = vmatpush.msra.mxu0 %v252
      %268 = vmatpush.msra.mxu0 %v251
      %269 = vmatpush.msra.mxu0 %v250
      %270 = vmatpush.msra.mxu0 %v249
      %271 = vmatpush.msra.mxu0 %v248
      %272 = vmatpush.msra.mxu0 %v247
      %273 = vmatpush.msra.mxu0 %v246
      %274 = vmatpush.msra.mxu0 %v245
      %275 = vmatpush.msra.mxu0 %v244
      %276 = vmatmul.f32.gmra.mxu0 %v243
      %v277 = vpop.f32.mrf.mxu0
      %v278 = vadd.f32 0.0, %v277
      %279 = vdwg.mxu0
      %v280 = vmul.f32 %v278, %v278
      %v281 = vld [vmem:[%s2] sm:$0xff]
      %v282 = vld [vmem:[%s2 + $0x8] sm:$0xff]
      %vm283 = vcmask 130048
      %v285 = vsel %vm283, %v280, 0
      %287 = vmatpush.msra.mxu0 0.0
      %288 = vmatpush.msra.mxu0 0.0
      %289 = vmatpush.msra.mxu0 0.0
      %290 = vmatpush.msra.mxu0 0.0
      %291 = vmatpush.msra.mxu0 0.0
      %292 = vmatpush.msra.mxu0 0.0
      %293 = vmatpush.msra.mxu0 0.0
      %294 = vmatpush.msra.mxu0 0.0
      %295 = vmatpush.msra.mxu0 0.0
      %296 = vmatpush.msra.mxu0 0.0
      %297 = vmatpush.msra.mxu0 0.0
      %298 = vmatpush.msra.mxu0 0.0
      %299 = vmatpush.msra.mxu0 0.0
      %300 = vmatpush.msra.mxu0 0.0
      %301 = vmatpush.msra.mxu0 %v282
      %302 = vmatpush.msra.mxu0 %v281
      %303 = vmatmul.f32.gmra.mxu0 %v285
      %v304 = vpop.f32.mrf.mxu0
      %v305 = vadd.f32 0.0, %v304
      %306 = vdwg.mxu0
      %v307 = vrsqrt.pop %v305
      %v308 = vmul.f32 %v307, %v305
      %v309 = vmul.f32 %v308, %v307
      %v310 = vmul.f32 0.5, %v309
      %v311 = vsub.f32 1.5, %v310
      %v312 = vmul.f32 %v307, %v311
      %v313 = vmul.f32 %v305, %v312
      %vm314 = vcmp.eq.f32.partialorder %v305, inf
      %v315 = vsel %vm314, %v305, %v313
      %vm316 = vcmp.eq.f32.partialorder %v305, 0.0
      %v317 = vand.u32 %v305, 2147483648
      %v318 = vsel %vm316, %v317, %v315
      %v319 = vld [vmem:[%s4] sm:$0x1]
      %vm320 = vcmask 64512
      %v322 = vsel %vm320, %v319, 0
      %324 = vmatpush.msra.mxu0 0.0
      %325 = vmatpush.msra.mxu0 0.0
      %326 = vmatpush.msra.mxu0 0.0
      %327 = vmatpush.msra.mxu0 0.0
      %328 = vmatpush.msra.mxu0 0.0
      %329 = vmatpush.msra.mxu0 0.0
      %330 = vmatpush.msra.mxu0 0.0
      %331 = vmatpush.msra.mxu0 0.0
      %332 = vmatpush.msra.mxu0 0.0
      %333 = vmatpush.msra.mxu0 0.0
      %334 = vmatpush.msra.mxu0 0.0
      %335 = vmatpush.msra.mxu0 0.0
      %336 = vmatpush.msra.mxu0 0.0
      %337 = vmatpush.msra.mxu0 0.0
      %338 = vmatpush.msra.mxu0 0.0
      %339 = vmatpush.msra.mxu0 %v318
      %340 = vmatmul.f32.gmra.mxu0 %v322
      %v341 = vpop.f32.mrf.mxu0
      %v342 = vadd.f32 0.0, %v341
      %343 = vdwg.mxu0
      %v344 = vld [vmem:[%s3] sm:$0xff]
      %v346 = vsel %vm320, %v342, 0
      %348 = vmatpush.msra.mxu0 0.0
      %349 = vmatpush.msra.mxu0 0.0
      %350 = vmatpush.msra.mxu0 0.0
      %351 = vmatpush.msra.mxu0 0.0
      %352 = vmatpush.msra.mxu0 0.0
      %353 = vmatpush.msra.mxu0 0.0
      %354 = vmatpush.msra.mxu0 0.0
      %355 = vmatpush.msra.mxu0 0.0
      %356 = vmatpush.msra.mxu0 0.0
      %357 = vmatpush.msra.mxu0 0.0
      %358 = vmatpush.msra.mxu0 0.0
      %359 = vmatpush.msra.mxu0 0.0
      %360 = vmatpush.msra.mxu0 0.0
      %361 = vmatpush.msra.mxu0 0.0
      %362 = vmatpush.msra.mxu0 0.0
      %363 = vmatpush.msra.mxu0 %v344
      %364 = vmatmul.f32.gmra.mxu0 %v346
      %v365 = vpop.f32.mrf.mxu0
      %v366 = vadd.f32 0.0, %v365
      %367 = vdwg.mxu0
      %v368 = vld [vmem:[%s236] sm:$0x1]
      %v369 = vadd.f32 %v368, %v366
      %vm370 = vcmask 24576
      %371 = vst.msk [vmem:[%s236] sm:$0x1] %vm370, %v369
      // Predicated region
      $region45: #{tpu_custom_call.1} parent=39 // pred_check
        %p372 = pneg %p237
      $region46: #{tpu_custom_call.1} parent=39 // pred_check_branch
        %374 = sbr.rel (%p372) target = $region48
      $region47: #{tpu_custom_call.1} parent=39 // pred_region
        %v375 = vld [vmem:[%s236] sm:$0x1]
        %v376 = vmul.f32 %v375, 0.25
        %377 = vst.msk [vmem:[%s236] sm:$0x1] %vm370, %v376
      $region48: #{tpu_custom_call.1} parent=39 // pred_fallthru
        _
      %p378 = scmp.lt.s32.totalorder %s20, 5
      %s379 = scalar_select %p378, %s20, 5
      %s380 = scalar_lea.vmem %s5, %s379
      // Predicated region
      $region49: #{tpu_custom_call.1} parent=39 // pred_check
        %p381 = pneg %p158
      $region50: #{tpu_custom_call.1} parent=39 // pred_check_branch
        %383 = sbr.rel (%p381) target = $region52
      $region51: #{tpu_custom_call.1} parent=39 // pred_region
        _
      $region52: #{tpu_custom_call.1} parent=39 // pred_fallthru
        _
    $region40: #{tpu_custom_call.1} parent=5 // pred_fallthru
      _
    %p384 = scmp.le.s32.totalorder 2, %s11
    // Predicated region
    $region53: #{tpu_custom_call.1} parent=5 // pred_check
      %p385 = pneg %p384
    $region54: #{tpu_custom_call.1} parent=5 // pred_check_branch
      %387 = sbr.rel (%p385) target = $region56
    $region55: #{tpu_custom_call.1} parent=5 // pred_region
      %s388 = ssub.s32 %s11, 2
      // Predicated region
      $region57: #{tpu_custom_call.1} parent=55 // pred_check
        %p389 = pneg %p164
      $region58: #{tpu_custom_call.1} parent=55 // pred_check_branch
        %391 = sbr.rel (%p389) target = $region60
      $region59: #{tpu_custom_call.1} parent=55 // pred_region
        %p392 = scmp.lt.s32.totalorder %s22, 5
        %s393 = scalar_select %p392, %s22, 5
        %s394 = scalar_lea.vmem %s5, %s393
      $region60: #{tpu_custom_call.1} parent=55 // pred_fallthru
        _
    $region56: #{tpu_custom_call.1} parent=5 // pred_fallthru
      _
  $region6: #{tpu_custom_call.1} parent=0 // loop_footer
    %s15 = sadd.s32 1, %s11
  $region7: #{tpu_custom_call.1} parent=0 // loop_footer_branch
    %10 = sbr.rel target = $region3
  $region8: #{tpu_custom_call.1} parent=0 // loop_exit
    _

</llo_original>
